<compile_context>
chip_gen: v6e
topology: v6e:2x2x1
jax: 0.10.0
libtpu: 0.0.40
codegen_flags: <defaults>
</compile_context>

<pallas_src>
import functools
import math

import jax
import jax.numpy as jnp
from jax.experimental import pallas as pl
from jax.experimental.pallas import tpu as pltpu


def _round_up(x, m):
    return ((x + m - 1) // m) * m


def dcl_kernel(z_ref, out_ref, *, num_trans, z_dim, inv_temp, scale):
    T, D = num_trans, z_dim
    zT = z_ref[...].astype(jnp.float32)          # (T*D, bb): batch on lanes
    bb = zT.shape[1]

    # Raw per-view slabs + folded inverse norms.  rsqrt(max(ss, 1e-24)) is the
    # squared form of F.normalize's max(||x||, 1e-12) eps.  No normalized-slab
    # materialization: normalization is applied per pair as a (1, bb) scale.
    slabs = []
    inv_n = []
    for t in range(T):                           # T small & static -> unrolled
        zt = zT[t * D:(t + 1) * D, :]            # (D, bb) sublane-aligned slice
        ss = jnp.sum(zt * zt, axis=0, keepdims=True)         # (1, bb)
        inv_n.append(jax.lax.rsqrt(jnp.maximum(ss, 1e-24)))  # EUP, cheap
        slabs.append(zt)

    # Symmetric pair loop (t outer, s inner): each off-diagonal dot product is
    # computed and exp'd exactly once and added to both rows, so the diagonal
    # never exists (no exp(1/temp) cancellation trick, no where-mask).
    acc = [jnp.zeros((1, bb), jnp.float32) for _ in range(T)]
    log_pos = [None] * (T - 1)                   # col (0, s) == log(pos_sim[s-1])
    for t in range(T):
        inv_t = inv_n[t] * inv_temp              # fold 1/temp once per row t
        for s in range(t + 1, T):
            raw = jnp.sum(slabs[t] * slabs[s], axis=0, keepdims=True)  # (1, bb)
            col = raw * (inv_t * inv_n[s])       # <zn_t, zn_s> / temp
            e = jnp.exp(col)
            acc[t] = acc[t] + e
            acc[s] = acc[s] + e
            if t == 0:
                log_pos[s - 1] = col

    # loss_b = sum_{i=1..T-1} (log(trans_i) - log(pos_i)) * scale   (row 0 never
    # enters; no epilogue mask needed).
    loss = jnp.zeros((1, bb), jnp.float32)
    for i in range(1, T):
        loss = loss + (jnp.log(acc[i]) - log_pos[i - 1])
    out_ref[...] = (loss * scale).astype(out_ref.dtype)


def dcl_forward(z, temperature=0.1, block_b=2048):
    """DCL_.forward(z).  z: (B, T, D) -> loss: (B,) float32.

    block_b: max batch rows per grid step (multiple of 128).  The wrapper also
    forces >= 2 grid steps whenever B >= 256 so the pipeline double-buffers and
    v7x's two TensorCores both get work.
    """
    B, T, D = z.shape
    K = T - 1
    scale = float(1.0 / abs(K * math.log(1.0 / K)))
    TD = T * D

    # Lane-dense HBM layout: (T*D, B) so the BlockSpec DMA delivers blocks with
    # the batch axis on lanes and no in-kernel transpose is needed.  The reshape
    # is free; the transpose is a single XLA HBM pass (cheap on v6e/v7x; on v5e
    # keep z in bf16 to halve its cost).  Input dtype is preserved (bf16 stays
    # bf16 in HBM and is upcast inside the kernel).
    z2 = jnp.transpose(z.reshape(B, TD))         # (TD, B)

    # Block width: multiple of 128, capped so the grid has >= 2 steps when B
    # allows (DMA/compute overlap + megacore sharding on v7x).
    Bp128 = _round_up(B, 128)
    bb = min(int(block_b), Bp128)
    if B >= 256:
        bb = min(bb, _round_up(pl.cdiv(Bp128, 2), 128))
    bb = max(128, _round_up(bb, 128))
    Bp = _round_up(B, bb)
    if Bp != B:
        # Zero columns give finite dummy losses (acc=T-1, log_pos=0); sliced off.
        z2 = jnp.pad(z2, ((0, 0), (0, Bp - B)))

    kernel = functools.partial(
        dcl_kernel, num_trans=T, z_dim=D,
        inv_temp=float(1.0 / temperature), scale=scale)

    out = pl.pallas_call(
        kernel,
        out_shape=jax.ShapeDtypeStruct((1, Bp), jnp.float32),
        grid=(Bp // bb,),
        in_specs=[pl.BlockSpec((TD, bb), lambda i: (0, i))],
        out_specs=pl.BlockSpec((1, bb), lambda i: (0, i)),
        compiler_params=pltpu.CompilerParams(
            dimension_semantics=("parallel",),
            vmem_limit_bytes=32 * 1024 * 1024),
    )(z2)
    return out[0, :B]


def dcl_reference(z, temperature=0.1):
    """Pure-JAX reference mirroring the PyTorch DCL_.forward, for verification."""
    z = z.astype(jnp.float32)
    zn = z / jnp.maximum(jnp.linalg.norm(z, axis=-1, keepdims=True), 1e-12)
    B, T, D = z.shape
    sim = jnp.exp(jnp.einsum("btd,bsd->bts", zn, zn) / temperature)
    eye = jnp.eye(T, dtype=sim.dtype)[None]
    row_sums = jnp.sum(sim * (1.0 - eye), axis=-1)
    trans_matrix = row_sums[:, 1:]
    pos_sim = jnp.exp(jnp.sum(zn[:, 1:] * zn[:, 0:1], axis=-1) / temperature)
    K = T - 1
    scale = 1.0 / abs(K * math.log(1.0 / K))
    loss_tensor = (jnp.log(trans_matrix) - jnp.log(pos_sim)) * scale
    return loss_tensor.sum(1)


if __name__ == "__main__":
    key = jax.random.PRNGKey(0)
    B, T, D = 256, 8, 32          # batch, num_trans, z_dim
    z = jax.random.normal(key, (B, T, D), dtype=jnp.float32)

    # B=256 -> bb=128, grid of 2 steps: exercises the pipelined / megacore path.
    loss = dcl_forward(z, temperature=0.1)
    jax.block_until_ready(loss)

    ref = dcl_reference(z, temperature=0.1)
    assert loss.shape == (B,)
    assert jnp.allclose(loss, ref, rtol=2e-4, atol=2e-4), (loss, ref)

    print("KERNEL_OK")
</pallas_src>

<mosaic_0001>
module attributes {stable_mosaic.version = 11 : i64} {
  func.func @dcl_kernel(%arg0: i32, %arg1: memref<256x128xf32, #tpu.memory_space<vmem>>, %arg2: memref<1x128xf32, #tpu.memory_space<vmem>>) attributes {dimension_semantics = [#tpu.dimension_semantics<parallel>], iteration_bounds = array<i64: 2>, scalar_prefetch = 0 : i64, scratch_operands = 0 : i64, tpu.core_type = #tpu.core_type<tc>, window_params = [{transform_indices = @transform_0, window_bounds = array<i64: 256, 128>}, {transform_indices = @transform_1, window_bounds = array<i64: 1, 128>}]} {
    %c0 = arith.constant 0 : index
    %c0_0 = arith.constant 0 : index
    %0 = vector.load %arg1[%c0, %c0_0] : memref<256x128xf32, #tpu.memory_space<vmem>>, vector<256x128xf32>
    %1 = vector.extract_strided_slice %0 {offsets = [0, 0], sizes = [32, 128], strides = [1, 1]} : vector<256x128xf32> to vector<32x128xf32>
    %2 = arith.mulf %1, %1 : vector<32x128xf32>
    %cst = arith.constant dense<0.000000e+00> : vector<128xf32>
    %3 = vector.multi_reduction <add>, %2, %cst [0] : vector<32x128xf32> to vector<128xf32>
    %4 = vector.shape_cast %3 : vector<128xf32> to vector<1x128xf32>
    %cst_1 = arith.constant 1.000000e-24 : f32
    %5 = vector.broadcast %cst_1 : f32 to vector<1x128xf32>
    %6 = arith.maximumf %4, %5 : vector<1x128xf32>
    %7 = math.rsqrt %6 : vector<1x128xf32>
    %8 = vector.extract_strided_slice %0 {offsets = [32, 0], sizes = [32, 128], strides = [1, 1]} : vector<256x128xf32> to vector<32x128xf32>
    %9 = arith.mulf %8, %8 : vector<32x128xf32>
    %cst_2 = arith.constant dense<0.000000e+00> : vector<128xf32>
    %10 = vector.multi_reduction <add>, %9, %cst_2 [0] : vector<32x128xf32> to vector<128xf32>
    %11 = vector.shape_cast %10 : vector<128xf32> to vector<1x128xf32>
    %cst_3 = arith.constant 1.000000e-24 : f32
    %12 = vector.broadcast %cst_3 : f32 to vector<1x128xf32>
    %13 = arith.maximumf %11, %12 : vector<1x128xf32>
    %14 = math.rsqrt %13 : vector<1x128xf32>
    %15 = vector.extract_strided_slice %0 {offsets = [64, 0], sizes = [32, 128], strides = [1, 1]} : vector<256x128xf32> to vector<32x128xf32>
    %16 = arith.mulf %15, %15 : vector<32x128xf32>
    %cst_4 = arith.constant dense<0.000000e+00> : vector<128xf32>
    %17 = vector.multi_reduction <add>, %16, %cst_4 [0] : vector<32x128xf32> to vector<128xf32>
    %18 = vector.shape_cast %17 : vector<128xf32> to vector<1x128xf32>
    %cst_5 = arith.constant 1.000000e-24 : f32
    %19 = vector.broadcast %cst_5 : f32 to vector<1x128xf32>
    %20 = arith.maximumf %18, %19 : vector<1x128xf32>
    %21 = math.rsqrt %20 : vector<1x128xf32>
    %22 = vector.extract_strided_slice %0 {offsets = [96, 0], sizes = [32, 128], strides = [1, 1]} : vector<256x128xf32> to vector<32x128xf32>
    %23 = arith.mulf %22, %22 : vector<32x128xf32>
    %cst_6 = arith.constant dense<0.000000e+00> : vector<128xf32>
    %24 = vector.multi_reduction <add>, %23, %cst_6 [0] : vector<32x128xf32> to vector<128xf32>
    %25 = vector.shape_cast %24 : vector<128xf32> to vector<1x128xf32>
    %cst_7 = arith.constant 1.000000e-24 : f32
    %26 = vector.broadcast %cst_7 : f32 to vector<1x128xf32>
    %27 = arith.maximumf %25, %26 : vector<1x128xf32>
    %28 = math.rsqrt %27 : vector<1x128xf32>
    %29 = vector.extract_strided_slice %0 {offsets = [128, 0], sizes = [32, 128], strides = [1, 1]} : vector<256x128xf32> to vector<32x128xf32>
    %30 = arith.mulf %29, %29 : vector<32x128xf32>
    %cst_8 = arith.constant dense<0.000000e+00> : vector<128xf32>
    %31 = vector.multi_reduction <add>, %30, %cst_8 [0] : vector<32x128xf32> to vector<128xf32>
    %32 = vector.shape_cast %31 : vector<128xf32> to vector<1x128xf32>
    %cst_9 = arith.constant 1.000000e-24 : f32
    %33 = vector.broadcast %cst_9 : f32 to vector<1x128xf32>
    %34 = arith.maximumf %32, %33 : vector<1x128xf32>
    %35 = math.rsqrt %34 : vector<1x128xf32>
    %36 = vector.extract_strided_slice %0 {offsets = [160, 0], sizes = [32, 128], strides = [1, 1]} : vector<256x128xf32> to vector<32x128xf32>
    %37 = arith.mulf %36, %36 : vector<32x128xf32>
    %cst_10 = arith.constant dense<0.000000e+00> : vector<128xf32>
    %38 = vector.multi_reduction <add>, %37, %cst_10 [0] : vector<32x128xf32> to vector<128xf32>
    %39 = vector.shape_cast %38 : vector<128xf32> to vector<1x128xf32>
    %cst_11 = arith.constant 1.000000e-24 : f32
    %40 = vector.broadcast %cst_11 : f32 to vector<1x128xf32>
    %41 = arith.maximumf %39, %40 : vector<1x128xf32>
    %42 = math.rsqrt %41 : vector<1x128xf32>
    %43 = vector.extract_strided_slice %0 {offsets = [192, 0], sizes = [32, 128], strides = [1, 1]} : vector<256x128xf32> to vector<32x128xf32>
    %44 = arith.mulf %43, %43 : vector<32x128xf32>
    %cst_12 = arith.constant dense<0.000000e+00> : vector<128xf32>
    %45 = vector.multi_reduction <add>, %44, %cst_12 [0] : vector<32x128xf32> to vector<128xf32>
    %46 = vector.shape_cast %45 : vector<128xf32> to vector<1x128xf32>
    %cst_13 = arith.constant 1.000000e-24 : f32
    %47 = vector.broadcast %cst_13 : f32 to vector<1x128xf32>
    %48 = arith.maximumf %46, %47 : vector<1x128xf32>
    %49 = math.rsqrt %48 : vector<1x128xf32>
    %50 = vector.extract_strided_slice %0 {offsets = [224, 0], sizes = [32, 128], strides = [1, 1]} : vector<256x128xf32> to vector<32x128xf32>
    %51 = arith.mulf %50, %50 : vector<32x128xf32>
    %cst_14 = arith.constant dense<0.000000e+00> : vector<128xf32>
    %52 = vector.multi_reduction <add>, %51, %cst_14 [0] : vector<32x128xf32> to vector<128xf32>
    %53 = vector.shape_cast %52 : vector<128xf32> to vector<1x128xf32>
    %cst_15 = arith.constant 1.000000e-24 : f32
    %54 = vector.broadcast %cst_15 : f32 to vector<1x128xf32>
    %55 = arith.maximumf %53, %54 : vector<1x128xf32>
    %56 = math.rsqrt %55 : vector<1x128xf32>
    %cst_16 = arith.constant 0.000000e+00 : f32
    %57 = vector.broadcast %cst_16 : f32 to vector<1x128xf32>
    %cst_17 = arith.constant 0.000000e+00 : f32
    %58 = vector.broadcast %cst_17 : f32 to vector<1x128xf32>
    %cst_18 = arith.constant 0.000000e+00 : f32
    %59 = vector.broadcast %cst_18 : f32 to vector<1x128xf32>
    %cst_19 = arith.constant 0.000000e+00 : f32
    %60 = vector.broadcast %cst_19 : f32 to vector<1x128xf32>
    %cst_20 = arith.constant 0.000000e+00 : f32
    %61 = vector.broadcast %cst_20 : f32 to vector<1x128xf32>
    %cst_21 = arith.constant 0.000000e+00 : f32
    %62 = vector.broadcast %cst_21 : f32 to vector<1x128xf32>
    %cst_22 = arith.constant 0.000000e+00 : f32
    %63 = vector.broadcast %cst_22 : f32 to vector<1x128xf32>
    %cst_23 = arith.constant 1.000000e+01 : f32
    %64 = vector.broadcast %cst_23 : f32 to vector<1x128xf32>
    %65 = arith.mulf %7, %64 : vector<1x128xf32>
    %66 = arith.mulf %1, %8 : vector<32x128xf32>
    %cst_24 = arith.constant dense<0.000000e+00> : vector<128xf32>
    %67 = vector.multi_reduction <add>, %66, %cst_24 [0] : vector<32x128xf32> to vector<128xf32>
    %68 = vector.shape_cast %67 : vector<128xf32> to vector<1x128xf32>
    %69 = arith.mulf %65, %14 : vector<1x128xf32>
    %70 = arith.mulf %68, %69 : vector<1x128xf32>
    %71 = math.exp %70 : vector<1x128xf32>
    %72 = arith.addf %57, %71 : vector<1x128xf32>
    %73 = arith.mulf %1, %15 : vector<32x128xf32>
    %cst_25 = arith.constant dense<0.000000e+00> : vector<128xf32>
    %74 = vector.multi_reduction <add>, %73, %cst_25 [0] : vector<32x128xf32> to vector<128xf32>
    %75 = vector.shape_cast %74 : vector<128xf32> to vector<1x128xf32>
    %76 = arith.mulf %65, %21 : vector<1x128xf32>
    %77 = arith.mulf %75, %76 : vector<1x128xf32>
    %78 = math.exp %77 : vector<1x128xf32>
    %79 = arith.addf %58, %78 : vector<1x128xf32>
    %80 = arith.mulf %1, %22 : vector<32x128xf32>
    %cst_26 = arith.constant dense<0.000000e+00> : vector<128xf32>
    %81 = vector.multi_reduction <add>, %80, %cst_26 [0] : vector<32x128xf32> to vector<128xf32>
    %82 = vector.shape_cast %81 : vector<128xf32> to vector<1x128xf32>
    %83 = arith.mulf %65, %28 : vector<1x128xf32>
    %84 = arith.mulf %82, %83 : vector<1x128xf32>
    %85 = math.exp %84 : vector<1x128xf32>
    %86 = arith.addf %59, %85 : vector<1x128xf32>
    %87 = arith.mulf %1, %29 : vector<32x128xf32>
    %cst_27 = arith.constant dense<0.000000e+00> : vector<128xf32>
    %88 = vector.multi_reduction <add>, %87, %cst_27 [0] : vector<32x128xf32> to vector<128xf32>
    %89 = vector.shape_cast %88 : vector<128xf32> to vector<1x128xf32>
    %90 = arith.mulf %65, %35 : vector<1x128xf32>
    %91 = arith.mulf %89, %90 : vector<1x128xf32>
    %92 = math.exp %91 : vector<1x128xf32>
    %93 = arith.addf %60, %92 : vector<1x128xf32>
    %94 = arith.mulf %1, %36 : vector<32x128xf32>
    %cst_28 = arith.constant dense<0.000000e+00> : vector<128xf32>
    %95 = vector.multi_reduction <add>, %94, %cst_28 [0] : vector<32x128xf32> to vector<128xf32>
    %96 = vector.shape_cast %95 : vector<128xf32> to vector<1x128xf32>
    %97 = arith.mulf %65, %42 : vector<1x128xf32>
    %98 = arith.mulf %96, %97 : vector<1x128xf32>
    %99 = math.exp %98 : vector<1x128xf32>
    %100 = arith.addf %61, %99 : vector<1x128xf32>
    %101 = arith.mulf %1, %43 : vector<32x128xf32>
    %cst_29 = arith.constant dense<0.000000e+00> : vector<128xf32>
    %102 = vector.multi_reduction <add>, %101, %cst_29 [0] : vector<32x128xf32> to vector<128xf32>
    %103 = vector.shape_cast %102 : vector<128xf32> to vector<1x128xf32>
    %104 = arith.mulf %65, %49 : vector<1x128xf32>
    %105 = arith.mulf %103, %104 : vector<1x128xf32>
    %106 = math.exp %105 : vector<1x128xf32>
    %107 = arith.addf %62, %106 : vector<1x128xf32>
    %108 = arith.mulf %1, %50 : vector<32x128xf32>
    %cst_30 = arith.constant dense<0.000000e+00> : vector<128xf32>
    %109 = vector.multi_reduction <add>, %108, %cst_30 [0] : vector<32x128xf32> to vector<128xf32>
    %110 = vector.shape_cast %109 : vector<128xf32> to vector<1x128xf32>
    %111 = arith.mulf %65, %56 : vector<1x128xf32>
    %112 = arith.mulf %110, %111 : vector<1x128xf32>
    %113 = math.exp %112 : vector<1x128xf32>
    %114 = arith.addf %63, %113 : vector<1x128xf32>
    %cst_31 = arith.constant 1.000000e+01 : f32
    %115 = vector.broadcast %cst_31 : f32 to vector<1x128xf32>
    %116 = arith.mulf %14, %115 : vector<1x128xf32>
    %117 = arith.mulf %8, %15 : vector<32x128xf32>
    %cst_32 = arith.constant dense<0.000000e+00> : vector<128xf32>
    %118 = vector.multi_reduction <add>, %117, %cst_32 [0] : vector<32x128xf32> to vector<128xf32>
    %119 = vector.shape_cast %118 : vector<128xf32> to vector<1x128xf32>
    %120 = arith.mulf %116, %21 : vector<1x128xf32>
    %121 = arith.mulf %119, %120 : vector<1x128xf32>
    %122 = math.exp %121 : vector<1x128xf32>
    %123 = arith.addf %72, %122 : vector<1x128xf32>
    %124 = arith.addf %79, %122 : vector<1x128xf32>
    %125 = arith.mulf %8, %22 : vector<32x128xf32>
    %cst_33 = arith.constant dense<0.000000e+00> : vector<128xf32>
    %126 = vector.multi_reduction <add>, %125, %cst_33 [0] : vector<32x128xf32> to vector<128xf32>
    %127 = vector.shape_cast %126 : vector<128xf32> to vector<1x128xf32>
    %128 = arith.mulf %116, %28 : vector<1x128xf32>
    %129 = arith.mulf %127, %128 : vector<1x128xf32>
    %130 = math.exp %129 : vector<1x128xf32>
    %131 = arith.addf %123, %130 : vector<1x128xf32>
    %132 = arith.addf %86, %130 : vector<1x128xf32>
    %133 = arith.mulf %8, %29 : vector<32x128xf32>
    %cst_34 = arith.constant dense<0.000000e+00> : vector<128xf32>
    %134 = vector.multi_reduction <add>, %133, %cst_34 [0] : vector<32x128xf32> to vector<128xf32>
    %135 = vector.shape_cast %134 : vector<128xf32> to vector<1x128xf32>
    %136 = arith.mulf %116, %35 : vector<1x128xf32>
    %137 = arith.mulf %135, %136 : vector<1x128xf32>
    %138 = math.exp %137 : vector<1x128xf32>
    %139 = arith.addf %131, %138 : vector<1x128xf32>
    %140 = arith.addf %93, %138 : vector<1x128xf32>
    %141 = arith.mulf %8, %36 : vector<32x128xf32>
    %cst_35 = arith.constant dense<0.000000e+00> : vector<128xf32>
    %142 = vector.multi_reduction <add>, %141, %cst_35 [0] : vector<32x128xf32> to vector<128xf32>
    %143 = vector.shape_cast %142 : vector<128xf32> to vector<1x128xf32>
    %144 = arith.mulf %116, %42 : vector<1x128xf32>
    %145 = arith.mulf %143, %144 : vector<1x128xf32>
    %146 = math.exp %145 : vector<1x128xf32>
    %147 = arith.addf %139, %146 : vector<1x128xf32>
    %148 = arith.addf %100, %146 : vector<1x128xf32>
    %149 = arith.mulf %8, %43 : vector<32x128xf32>
    %cst_36 = arith.constant dense<0.000000e+00> : vector<128xf32>
    %150 = vector.multi_reduction <add>, %149, %cst_36 [0] : vector<32x128xf32> to vector<128xf32>
    %151 = vector.shape_cast %150 : vector<128xf32> to vector<1x128xf32>
    %152 = arith.mulf %116, %49 : vector<1x128xf32>
    %153 = arith.mulf %151, %152 : vector<1x128xf32>
    %154 = math.exp %153 : vector<1x128xf32>
    %155 = arith.addf %147, %154 : vector<1x128xf32>
    %156 = arith.addf %107, %154 : vector<1x128xf32>
    %157 = arith.mulf %8, %50 : vector<32x128xf32>
    %cst_37 = arith.constant dense<0.000000e+00> : vector<128xf32>
    %158 = vector.multi_reduction <add>, %157, %cst_37 [0] : vector<32x128xf32> to vector<128xf32>
    %159 = vector.shape_cast %158 : vector<128xf32> to vector<1x128xf32>
    %160 = arith.mulf %116, %56 : vector<1x128xf32>
    %161 = arith.mulf %159, %160 : vector<1x128xf32>
    %162 = math.exp %161 : vector<1x128xf32>
    %163 = arith.addf %155, %162 : vector<1x128xf32>
    %164 = arith.addf %114, %162 : vector<1x128xf32>
    %cst_38 = arith.constant 1.000000e+01 : f32
    %165 = vector.broadcast %cst_38 : f32 to vector<1x128xf32>
    %166 = arith.mulf %21, %165 : vector<1x128xf32>
    %167 = arith.mulf %15, %22 : vector<32x128xf32>
    %cst_39 = arith.constant dense<0.000000e+00> : vector<128xf32>
    %168 = vector.multi_reduction <add>, %167, %cst_39 [0] : vector<32x128xf32> to vector<128xf32>
    %169 = vector.shape_cast %168 : vector<128xf32> to vector<1x128xf32>
    %170 = arith.mulf %166, %28 : vector<1x128xf32>
    %171 = arith.mulf %169, %170 : vector<1x128xf32>
    %172 = math.exp %171 : vector<1x128xf32>
    %173 = arith.addf %124, %172 : vector<1x128xf32>
    %174 = arith.addf %132, %172 : vector<1x128xf32>
    %175 = arith.mulf %15, %29 : vector<32x128xf32>
    %cst_40 = arith.constant dense<0.000000e+00> : vector<128xf32>
    %176 = vector.multi_reduction <add>, %175, %cst_40 [0] : vector<32x128xf32> to vector<128xf32>
    %177 = vector.shape_cast %176 : vector<128xf32> to vector<1x128xf32>
    %178 = arith.mulf %166, %35 : vector<1x128xf32>
    %179 = arith.mulf %177, %178 : vector<1x128xf32>
    %180 = math.exp %179 : vector<1x128xf32>
    %181 = arith.addf %173, %180 : vector<1x128xf32>
    %182 = arith.addf %140, %180 : vector<1x128xf32>
    %183 = arith.mulf %15, %36 : vector<32x128xf32>
    %cst_41 = arith.constant dense<0.000000e+00> : vector<128xf32>
    %184 = vector.multi_reduction <add>, %183, %cst_41 [0] : vector<32x128xf32> to vector<128xf32>
    %185 = vector.shape_cast %184 : vector<128xf32> to vector<1x128xf32>
    %186 = arith.mulf %166, %42 : vector<1x128xf32>
    %187 = arith.mulf %185, %186 : vector<1x128xf32>
    %188 = math.exp %187 : vector<1x128xf32>
    %189 = arith.addf %181, %188 : vector<1x128xf32>
    %190 = arith.addf %148, %188 : vector<1x128xf32>
    %191 = arith.mulf %15, %43 : vector<32x128xf32>
    %cst_42 = arith.constant dense<0.000000e+00> : vector<128xf32>
    %192 = vector.multi_reduction <add>, %191, %cst_42 [0] : vector<32x128xf32> to vector<128xf32>
    %193 = vector.shape_cast %192 : vector<128xf32> to vector<1x128xf32>
    %194 = arith.mulf %166, %49 : vector<1x128xf32>
    %195 = arith.mulf %193, %194 : vector<1x128xf32>
    %196 = math.exp %195 : vector<1x128xf32>
    %197 = arith.addf %189, %196 : vector<1x128xf32>
    %198 = arith.addf %156, %196 : vector<1x128xf32>
    %199 = arith.mulf %15, %50 : vector<32x128xf32>
    %cst_43 = arith.constant dense<0.000000e+00> : vector<128xf32>
    %200 = vector.multi_reduction <add>, %199, %cst_43 [0] : vector<32x128xf32> to vector<128xf32>
    %201 = vector.shape_cast %200 : vector<128xf32> to vector<1x128xf32>
    %202 = arith.mulf %166, %56 : vector<1x128xf32>
    %203 = arith.mulf %201, %202 : vector<1x128xf32>
    %204 = math.exp %203 : vector<1x128xf32>
    %205 = arith.addf %197, %204 : vector<1x128xf32>
    %206 = arith.addf %164, %204 : vector<1x128xf32>
    %cst_44 = arith.constant 1.000000e+01 : f32
    %207 = vector.broadcast %cst_44 : f32 to vector<1x128xf32>
    %208 = arith.mulf %28, %207 : vector<1x128xf32>
    %209 = arith.mulf %22, %29 : vector<32x128xf32>
    %cst_45 = arith.constant dense<0.000000e+00> : vector<128xf32>
    %210 = vector.multi_reduction <add>, %209, %cst_45 [0] : vector<32x128xf32> to vector<128xf32>
    %211 = vector.shape_cast %210 : vector<128xf32> to vector<1x128xf32>
    %212 = arith.mulf %208, %35 : vector<1x128xf32>
    %213 = arith.mulf %211, %212 : vector<1x128xf32>
    %214 = math.exp %213 : vector<1x128xf32>
    %215 = arith.addf %174, %214 : vector<1x128xf32>
    %216 = arith.addf %182, %214 : vector<1x128xf32>
    %217 = arith.mulf %22, %36 : vector<32x128xf32>
    %cst_46 = arith.constant dense<0.000000e+00> : vector<128xf32>
    %218 = vector.multi_reduction <add>, %217, %cst_46 [0] : vector<32x128xf32> to vector<128xf32>
    %219 = vector.shape_cast %218 : vector<128xf32> to vector<1x128xf32>
    %220 = arith.mulf %208, %42 : vector<1x128xf32>
    %221 = arith.mulf %219, %220 : vector<1x128xf32>
    %222 = math.exp %221 : vector<1x128xf32>
    %223 = arith.addf %215, %222 : vector<1x128xf32>
    %224 = arith.addf %190, %222 : vector<1x128xf32>
    %225 = arith.mulf %22, %43 : vector<32x128xf32>
    %cst_47 = arith.constant dense<0.000000e+00> : vector<128xf32>
    %226 = vector.multi_reduction <add>, %225, %cst_47 [0] : vector<32x128xf32> to vector<128xf32>
    %227 = vector.shape_cast %226 : vector<128xf32> to vector<1x128xf32>
    %228 = arith.mulf %208, %49 : vector<1x128xf32>
    %229 = arith.mulf %227, %228 : vector<1x128xf32>
    %230 = math.exp %229 : vector<1x128xf32>
    %231 = arith.addf %223, %230 : vector<1x128xf32>
    %232 = arith.addf %198, %230 : vector<1x128xf32>
    %233 = arith.mulf %22, %50 : vector<32x128xf32>
    %cst_48 = arith.constant dense<0.000000e+00> : vector<128xf32>
    %234 = vector.multi_reduction <add>, %233, %cst_48 [0] : vector<32x128xf32> to vector<128xf32>
    %235 = vector.shape_cast %234 : vector<128xf32> to vector<1x128xf32>
    %236 = arith.mulf %208, %56 : vector<1x128xf32>
    %237 = arith.mulf %235, %236 : vector<1x128xf32>
    %238 = math.exp %237 : vector<1x128xf32>
    %239 = arith.addf %231, %238 : vector<1x128xf32>
    %240 = arith.addf %206, %238 : vector<1x128xf32>
    %cst_49 = arith.constant 1.000000e+01 : f32
    %241 = vector.broadcast %cst_49 : f32 to vector<1x128xf32>
    %242 = arith.mulf %35, %241 : vector<1x128xf32>
    %243 = arith.mulf %29, %36 : vector<32x128xf32>
    %cst_50 = arith.constant dense<0.000000e+00> : vector<128xf32>
    %244 = vector.multi_reduction <add>, %243, %cst_50 [0] : vector<32x128xf32> to vector<128xf32>
    %245 = vector.shape_cast %244 : vector<128xf32> to vector<1x128xf32>
    %246 = arith.mulf %242, %42 : vector<1x128xf32>
    %247 = arith.mulf %245, %246 : vector<1x128xf32>
    %248 = math.exp %247 : vector<1x128xf32>
    %249 = arith.addf %216, %248 : vector<1x128xf32>
    %250 = arith.addf %224, %248 : vector<1x128xf32>
    %251 = arith.mulf %29, %43 : vector<32x128xf32>
    %cst_51 = arith.constant dense<0.000000e+00> : vector<128xf32>
    %252 = vector.multi_reduction <add>, %251, %cst_51 [0] : vector<32x128xf32> to vector<128xf32>
    %253 = vector.shape_cast %252 : vector<128xf32> to vector<1x128xf32>
    %254 = arith.mulf %242, %49 : vector<1x128xf32>
    %255 = arith.mulf %253, %254 : vector<1x128xf32>
    %256 = math.exp %255 : vector<1x128xf32>
    %257 = arith.addf %249, %256 : vector<1x128xf32>
    %258 = arith.addf %232, %256 : vector<1x128xf32>
    %259 = arith.mulf %29, %50 : vector<32x128xf32>
    %cst_52 = arith.constant dense<0.000000e+00> : vector<128xf32>
    %260 = vector.multi_reduction <add>, %259, %cst_52 [0] : vector<32x128xf32> to vector<128xf32>
    %261 = vector.shape_cast %260 : vector<128xf32> to vector<1x128xf32>
    %262 = arith.mulf %242, %56 : vector<1x128xf32>
    %263 = arith.mulf %261, %262 : vector<1x128xf32>
    %264 = math.exp %263 : vector<1x128xf32>
    %265 = arith.addf %257, %264 : vector<1x128xf32>
    %266 = arith.addf %240, %264 : vector<1x128xf32>
    %cst_53 = arith.constant 1.000000e+01 : f32
    %267 = vector.broadcast %cst_53 : f32 to vector<1x128xf32>
    %268 = arith.mulf %42, %267 : vector<1x128xf32>
    %269 = arith.mulf %36, %43 : vector<32x128xf32>
    %cst_54 = arith.constant dense<0.000000e+00> : vector<128xf32>
    %270 = vector.multi_reduction <add>, %269, %cst_54 [0] : vector<32x128xf32> to vector<128xf32>
    %271 = vector.shape_cast %270 : vector<128xf32> to vector<1x128xf32>
    %272 = arith.mulf %268, %49 : vector<1x128xf32>
    %273 = arith.mulf %271, %272 : vector<1x128xf32>
    %274 = math.exp %273 : vector<1x128xf32>
    %275 = arith.addf %250, %274 : vector<1x128xf32>
    %276 = arith.addf %258, %274 : vector<1x128xf32>
    %277 = arith.mulf %36, %50 : vector<32x128xf32>
    %cst_55 = arith.constant dense<0.000000e+00> : vector<128xf32>
    %278 = vector.multi_reduction <add>, %277, %cst_55 [0] : vector<32x128xf32> to vector<128xf32>
    %279 = vector.shape_cast %278 : vector<128xf32> to vector<1x128xf32>
    %280 = arith.mulf %268, %56 : vector<1x128xf32>
    %281 = arith.mulf %279, %280 : vector<1x128xf32>
    %282 = math.exp %281 : vector<1x128xf32>
    %283 = arith.addf %275, %282 : vector<1x128xf32>
    %284 = arith.addf %266, %282 : vector<1x128xf32>
    %cst_56 = arith.constant 1.000000e+01 : f32
    %285 = vector.broadcast %cst_56 : f32 to vector<1x128xf32>
    %286 = arith.mulf %49, %285 : vector<1x128xf32>
    %287 = arith.mulf %43, %50 : vector<32x128xf32>
    %cst_57 = arith.constant dense<0.000000e+00> : vector<128xf32>
    %288 = vector.multi_reduction <add>, %287, %cst_57 [0] : vector<32x128xf32> to vector<128xf32>
    %289 = vector.shape_cast %288 : vector<128xf32> to vector<1x128xf32>
    %290 = arith.mulf %286, %56 : vector<1x128xf32>
    %291 = arith.mulf %289, %290 : vector<1x128xf32>
    %292 = math.exp %291 : vector<1x128xf32>
    %293 = arith.addf %276, %292 : vector<1x128xf32>
    %294 = arith.addf %284, %292 : vector<1x128xf32>
    %cst_58 = arith.constant 0.000000e+00 : f32
    %295 = vector.broadcast %cst_58 : f32 to vector<1x128xf32>
    %296 = math.log %163 : vector<1x128xf32>
    %297 = arith.subf %296, %70 : vector<1x128xf32>
    %298 = arith.addf %295, %297 : vector<1x128xf32>
    %299 = math.log %205 : vector<1x128xf32>
    %300 = arith.subf %299, %77 : vector<1x128xf32>
    %301 = arith.addf %298, %300 : vector<1x128xf32>
    %302 = math.log %239 : vector<1x128xf32>
    %303 = arith.subf %302, %84 : vector<1x128xf32>
    %304 = arith.addf %301, %303 : vector<1x128xf32>
    %305 = math.log %265 : vector<1x128xf32>
    %306 = arith.subf %305, %91 : vector<1x128xf32>
    %307 = arith.addf %304, %306 : vector<1x128xf32>
    %308 = math.log %283 : vector<1x128xf32>
    %309 = arith.subf %308, %98 : vector<1x128xf32>
    %310 = arith.addf %307, %309 : vector<1x128xf32>
    %311 = math.log %293 : vector<1x128xf32>
    %312 = arith.subf %311, %105 : vector<1x128xf32>
    %313 = arith.addf %310, %312 : vector<1x128xf32>
    %314 = math.log %294 : vector<1x128xf32>
    %315 = arith.subf %314, %112 : vector<1x128xf32>
    %316 = arith.addf %313, %315 : vector<1x128xf32>
    %cst_59 = arith.constant 0.07341405 : f32
    %317 = vector.broadcast %cst_59 : f32 to vector<1x128xf32>
    %318 = arith.mulf %316, %317 : vector<1x128xf32>
    %c0_60 = arith.constant 0 : index
    %c0_61 = arith.constant 0 : index
    %319 = vector.load %arg2[%c0_60, %c0_61] : memref<1x128xf32, #tpu.memory_space<vmem>>, vector<1x128xf32>
    tpu.vector_store %arg2[%c0_60, %c0_61], %318 {strides = array<i32>} : memref<1x128xf32, #tpu.memory_space<vmem>>, vector<1x128xf32>,
    return
  }
  func.func @transform_0(%arg0: i32) -> (i32, i32) {
    %c0_i32 = arith.constant 0 : i32
    %c0_i32_0 = arith.constant 0 : i32
    return %c0_i32, %arg0 : i32, i32
  }
  func.func @transform_1(%arg0: i32) -> (i32, i32) {
    %c0_i32 = arith.constant 0 : i32
    %c0_i32_0 = arith.constant 0 : i32
    return %c0_i32, %arg0 : i32, i32
  }
}

</mosaic_0001>

<llo_original>
// kernel: tpu_custom_call.1
$region0: #{tpu_custom_call.1}
  #allocation0 [shape = 'u32[]', space=smem, size = 0x4, offset = 0x4, fixed_abs, tag = 'smem constant byte address 0x4 - core index']
  #allocation1 [shape = 'u32[144,128]{1,0:T(1,128)}', space=vmem, size = 0x12000, scoped, tag = 'internal scratch']
  %s0 = inlined_call_operand.hbm [shape: f32[256,256], index: 0, kind: input, shape index: {}]
  %s1 = inlined_call_operand.hbm [shape: f32[1,256], index: 1, kind: output, shape index: {}]
  %s2 = sld [smem:[#allocation0]]
  $region41: #{tpu_custom_call.1} parent=0
    _
  %s4 = ssub.s32 1, %s2
  %s5 = scalar_select 0, %s4, %s2
  $region1: #{tpu_custom_call.1} parent=0
    #allocation2 [shape = 'u8[262144]{0}', space=vmem, size = 0x40000, scoped, tag = 'input window, operand 0']
    #allocation3 [shape = 's32[2]{0}', space=sflag, size = 0x8, scoped, tag = 'scoped memory for tpu_custom_call.1']
    #allocation4 [shape = 's32[2]{0}', space=sflag, size = 0x8, scoped, tag = 'scoped memory for tpu_custom_call.1']
    #allocation5 [shape = 'u8[1024]{0}', space=vmem, size = 0x400, scoped, tag = 'output window, operand 0']
    %6 = vsyncpa [#allocation3], 0
    %s7 = scalar_lea.sflag [#allocation3], 1
    %8 = vsyncpa %s7, 0
    %9 = vsyncpa [#allocation4], 0
    %s10 = scalar_lea.sflag [#allocation4], 1
    %11 = vsyncpa %s10, 0
    loop: start=0, step=1, limit=4
    $region2: #{tpu_custom_call.1} parent=1 // loop_pre_header
      _
    $region3: #{tpu_custom_call.1} parent=1 // loop_header
      %s13 = sphi 0, %s17
      %p14 = scmp.ge.s32.totalorder %s13, 4
      %s23 = sphi 0, %s25
      %s26 = sphi 0, %s23
      %s27 = sphi 0, %s26
      %s43 = sphi 0, %s27
      %s49 = sphi 0, %s51
      %s52 = sphi 0, %s49
      %s53 = sphi 0, %s52
      %s69 = sphi 0, %s53
    $region4: #{tpu_custom_call.1} parent=1 // loop_header_branch
      %16 = sbr.rel (%p14) target = $region8
    $region5: #{tpu_custom_call.1} parent=1 // loop_body
      %s18 = ssub.s32 %s13, 1
      %s19 = ssub.s32 %s13, 2
      %s20 = sadd.s32 %s13, 1
      %s21 = ssub.s32 %s13, %s20
      %p22 = scmp.eq.s32.totalorder %s21, 0
      %s24 = sadd.s32 %s23, 1
      %s25 = scalar_select %p22, %s23, %s24
      %p28 = pneg %p22
      %p29 = scmp.eq.s32.totalorder %s13, 1
      %p30 = por %p28, %p29
      %p31 = scmp.ne.s32.totalorder %s23, %s26
      %p32 = scmp.eq.s32.totalorder %s13, 0
      %p33 = por %p31, %p32
      %p34 = scmp.ne.s32.totalorder %s23, %s26
      %p35 = scmp.eq.s32.totalorder %s18, 1
      %p36 = por %p34, %p35
      %p37 = scmp.ne.s32.totalorder %s26, %s27
      %p38 = scmp.eq.s32.totalorder %s18, 0
      %p39 = por %p37, %p38
      %p40 = scmp.ne.s32.totalorder %s26, %s27
      %p41 = scmp.eq.s32.totalorder %s19, 1
      %p42 = por %p40, %p41
      %p44 = scmp.ne.s32.totalorder %s27, %s43
      %p45 = scmp.eq.s32.totalorder %s19, 0
      %p46 = por %p44, %p45
      %s47 = ssub.s32 %s13, %s20
      %p48 = scmp.eq.s32.totalorder %s47, 0
      %s50 = sadd.s32 %s49, 1
      %s51 = scalar_select %p48, %s49, %s50
      %p54 = pneg %p48
      %p55 = scmp.eq.s32.totalorder %s13, 1
      %p56 = por %p54, %p55
      %p57 = scmp.ne.s32.totalorder %s49, %s52
      %p58 = scmp.eq.s32.totalorder %s13, 0
      %p59 = por %p57, %p58
      %p60 = scmp.ne.s32.totalorder %s49, %s52
      %p61 = scmp.eq.s32.totalorder %s18, 1
      %p62 = por %p60, %p61
      %p63 = scmp.ne.s32.totalorder %s52, %s53
      %p64 = scmp.eq.s32.totalorder %s18, 0
      %p65 = por %p63, %p64
      %p66 = scmp.ne.s32.totalorder %s52, %s53
      %p67 = scmp.eq.s32.totalorder %s19, 1
      %p68 = por %p66, %p67
      %p70 = scmp.ne.s32.totalorder %s53, %s69
      %p71 = scmp.eq.s32.totalorder %s19, 0
      %p72 = por %p70, %p71
      %p73 = scmp.le.s32.totalorder 1, %s13
      %p74 = scmp.lt.s32.totalorder %s13, 3
      %p75 = pnand %p73, %p74
      %p76 = pneg %p75
      // Predicated region
      $region9: #{tpu_custom_call.1} parent=5 // pred_check
        _
      $region10: #{tpu_custom_call.1} parent=5 // pred_check_branch
        %78 = sbr.rel (%p75) target = $region12
      $region11: #{tpu_custom_call.1} parent=5 // pred_region
        %s79 = ssub.s32 %s13, 1
      $region12: #{tpu_custom_call.1} parent=5 // pred_fallthru
        _
      %p80 = scmp.lt.s32.totalorder %s13, 2
      // Predicated region
      $region13: #{tpu_custom_call.1} parent=5 // pred_check
        %p81 = pneg %p80
      $region14: #{tpu_custom_call.1} parent=5 // pred_check_branch
        %83 = sbr.rel (%p81) target = $region16
      $region15: #{tpu_custom_call.1} parent=5 // pred_region
        // Predicated region
        $region17: #{tpu_custom_call.1} parent=15 // pred_check
          %p84 = pneg %p33
        $region18: #{tpu_custom_call.1} parent=15 // pred_check_branch
          %86 = sbr.rel (%p84) target = $region20
        $region19: #{tpu_custom_call.1} parent=15 // pred_region
          %s87 = sand.u32 %s23, 1
          %s88 = scalar_lea.sflag [#allocation3], %s87
          %s89 = sand.u32 %s23, 1
          %s90 = smul.addr %s89, 256
          %s91 = scalar_lea.vmem [#allocation2], %s90
          %s93 = ssub.s32 4096, 4096
          %94 = vsyncadd %s88, %s93
          %s95 = smul.addr %s13, 128
          %s96 = scalar_lea.hbm %s0, %s95
          %s97 = sshll.u32 %s91, 4
          %s98 = int_to_ptr.vmem [resolvable:$true] %s97
          %103 = dma.hbm_to_vmem [thread:$0]  %s96, 4096, %s98, %s88, 256, 128, 8
        $region20: #{tpu_custom_call.1} parent=15 // pred_fallthru
          _
      $region16: #{tpu_custom_call.1} parent=5 // pred_fallthru
        _
      %p104 = scmp.le.s32.totalorder 1, %s13
      %p105 = scmp.lt.s32.totalorder %s13, 3
      %p106 = pnand %p104, %p105
      %p107 = pneg %p106
      // Predicated region
      $region21: #{tpu_custom_call.1} parent=5 // pred_check
        _
      $region22: #{tpu_custom_call.1} parent=5 // pred_check_branch
        %109 = sbr.rel (%p106) target = $region24
      $region23: #{tpu_custom_call.1} parent=5 // pred_region
        %s110 = ssub.s32 %s13, 1
        %s111 = sand.u32 %s26, 1
        %s112 = scalar_lea.sflag [#allocation3], %s111
        %s113 = sand.u32 %s26, 1
        %s114 = smul.addr %s113, 256
        %s115 = scalar_lea.vmem [#allocation2], %s114
        // Predicated region
        $region25: #{tpu_custom_call.1} parent=23 // pred_check
          %p116 = pneg %p39
        $region26: #{tpu_custom_call.1} parent=23 // pred_check_branch
          %118 = sbr.rel (%p116) target = $region28
        $region27: #{tpu_custom_call.1} parent=23 // pred_region
          %119 = dma.done %s112, 4096
        $region28: #{tpu_custom_call.1} parent=23 // pred_fallthru
          _
        %s120 = sand.u32 %s26, 1
        %s121 = scalar_lea.sflag [#allocation3], %s120
        %s122 = sand.u32 %s26, 1
        %s123 = smul.addr %s122, 256
        %s124 = scalar_lea.vmem [#allocation2], %s123
        %p125 = pneg %p39
        %p126 = pneg %p36
        %p127 = pneg %p65
        %p128 = pneg %p62
        %s129 = sand.u32 %s52, 1
        %s130 = scalar_lea.sflag [#allocation4], %s129
        %s131 = sand.u32 %s52, 1
        %s132 = scalar_lea.vmem [#allocation5], %s131
        %v133 = vld [vmem:[%s115] sm:$0xff]
        %v134 = vld [vmem:[%s115 + $0x8] sm:$0xff]
        %v135 = vld [vmem:[%s115 + $0x10] sm:$0xff]
        %v136 = vld [vmem:[%s115 + $0x18] sm:$0xff]
        %v137 = vld [vmem:[%s115 + $0x20] sm:$0xff]
        %v138 = vld [vmem:[%s115 + $0x28] sm:$0xff]
        %v139 = vld [vmem:[%s115 + $0x30] sm:$0xff]
        %v140 = vld [vmem:[%s115 + $0x38] sm:$0xff]
        %v141 = vld [vmem:[%s115 + $0x40] sm:$0xff]
        %v142 = vld [vmem:[%s115 + $0x48] sm:$0xff]
        %v143 = vld [vmem:[%s115 + $0x50] sm:$0xff]
        %v144 = vld [vmem:[%s115 + $0x58] sm:$0xff]
        %v145 = vld [vmem:[%s115 + $0x60] sm:$0xff]
        %v146 = vld [vmem:[%s115 + $0x68] sm:$0xff]
        %v147 = vld [vmem:[%s115 + $0x70] sm:$0xff]
        %v148 = vld [vmem:[%s115 + $0x78] sm:$0xff]
        %v149 = vld [vmem:[%s115 + $0x80] sm:$0xff]
        %v150 = vld [vmem:[%s115 + $0x88] sm:$0xff]
        %v151 = vld [vmem:[%s115 + $0x90] sm:$0xff]
        %v152 = vld [vmem:[%s115 + $0x98] sm:$0xff]
        %v153 = vld [vmem:[%s115 + $0xa0] sm:$0xff]
        %v154 = vld [vmem:[%s115 + $0xa8] sm:$0xff]
        %v155 = vld [vmem:[%s115 + $0xb0] sm:$0xff]
        %v156 = vld [vmem:[%s115 + $0xb8] sm:$0xff]
        %v157 = vld [vmem:[%s115 + $0xc0] sm:$0xff]
        %v158 = vld [vmem:[%s115 + $0xc8] sm:$0xff]
        %v159 = vld [vmem:[%s115 + $0xd0] sm:$0xff]
        %v160 = vld [vmem:[%s115 + $0xd8] sm:$0xff]
        %v161 = vld [vmem:[%s115 + $0xe0] sm:$0xff]
        %v162 = vld [vmem:[%s115 + $0xe8] sm:$0xff]
        %v163 = vld [vmem:[%s115 + $0xf0] sm:$0xff]
        %v164 = vld [vmem:[%s115 + $0xf8] sm:$0xff]
        %v165 = vmul.f32 %v133, %v133
        %v166 = vmul.f32 %v134, %v134
        %v167 = vmul.f32 %v135, %v135
        %v168 = vmul.f32 %v136, %v136
        %v169 = vadd.f32 %v165, %v166
        %v170 = vadd.f32 %v169, %v167
        %v171 = vadd.f32 %v170, %v168
        %v172 = vrot.slane %v171, 4
        %v173 = vadd.f32 %v171, %v172
        %v174 = vrot.slane %v173, 2
        %v175 = vadd.f32 %v173, %v174
        %v176 = vrot.slane %v175, 1
        %v177 = vadd.f32 %v175, %v176
        %v178 = vmax.f32 %v177, 1e-24
        %v179 = vrsqrt.pop %v178
        %v180 = vmul.f32 %v137, %v137
        %v181 = vmul.f32 %v138, %v138
        %v182 = vmul.f32 %v139, %v139
        %v183 = vmul.f32 %v140, %v140
        %v184 = vadd.f32 %v180, %v181
        %v185 = vadd.f32 %v184, %v182
        %v186 = vadd.f32 %v185, %v183
        %v187 = vrot.slane %v186, 4
        %v188 = vadd.f32 %v186, %v187
        %v189 = vrot.slane %v188, 2
        %v190 = vadd.f32 %v188, %v189
        %v191 = vrot.slane %v190, 1
        %v192 = vadd.f32 %v190, %v191
        %v193 = vmax.f32 %v192, 1e-24
        %v194 = vrsqrt.pop %v193
        %v195 = vmul.f32 %v141, %v141
        %v196 = vmul.f32 %v142, %v142
        %v197 = vmul.f32 %v143, %v143
        %v198 = vmul.f32 %v144, %v144
        %v199 = vadd.f32 %v195, %v196
        %v200 = vadd.f32 %v199, %v197
        %v201 = vadd.f32 %v200, %v198
        %v202 = vrot.slane %v201, 4
        %v203 = vadd.f32 %v201, %v202
        %v204 = vrot.slane %v203, 2
        %v205 = vadd.f32 %v203, %v204
        %v206 = vrot.slane %v205, 1
        %v207 = vadd.f32 %v205, %v206
        %v208 = vmax.f32 %v207, 1e-24
        %v209 = vrsqrt.pop %v208
        %v210 = vmul.f32 %v145, %v145
        %v211 = vmul.f32 %v146, %v146
        %v212 = vmul.f32 %v147, %v147
        %v213 = vmul.f32 %v148, %v148
        %v214 = vadd.f32 %v210, %v211
        %v215 = vadd.f32 %v214, %v212
        %v216 = vadd.f32 %v215, %v213
        %v217 = vrot.slane %v216, 4
        %v218 = vadd.f32 %v216, %v217
        %v219 = vrot.slane %v218, 2
        %v220 = vadd.f32 %v218, %v219
        %v221 = vrot.slane %v220, 1
        %v222 = vadd.f32 %v220, %v221
        %v223 = vmax.f32 %v222, 1e-24
        %v224 = vrsqrt.pop %v223
        %v225 = vmul.f32 %v149, %v149
        %v226 = vmul.f32 %v150, %v150
        %v227 = vmul.f32 %v151, %v151
        %v228 = vmul.f32 %v152, %v152
        %v229 = vadd.f32 %v225, %v226
        %v230 = vadd.f32 %v229, %v227
        %v231 = vadd.f32 %v230, %v228
        %v232 = vrot.slane %v231, 4
        %v233 = vadd.f32 %v231, %v232
        %v234 = vrot.slane %v233, 2
        %v235 = vadd.f32 %v233, %v234
        %v236 = vrot.slane %v235, 1
        %v237 = vadd.f32 %v235, %v236
        %v238 = vmax.f32 %v237, 1e-24
        %v239 = vrsqrt.pop %v238
        %v240 = vmul.f32 %v153, %v153
        %v241 = vmul.f32 %v154, %v154
        %v242 = vmul.f32 %v155, %v155
        %v243 = vmul.f32 %v156, %v156
        %v244 = vadd.f32 %v240, %v241
        %v245 = vadd.f32 %v244, %v242
        %v246 = vadd.f32 %v245, %v243
        %v247 = vrot.slane %v246, 4
        %v248 = vadd.f32 %v246, %v247
        %v249 = vrot.slane %v248, 2
        %v250 = vadd.f32 %v248, %v249
        %v251 = vrot.slane %v250, 1
        %v252 = vadd.f32 %v250, %v251
        %v253 = vmax.f32 %v252, 1e-24
        %v254 = vrsqrt.pop %v253
        %v255 = vmul.f32 %v157, %v157
        %v256 = vmul.f32 %v158, %v158
        %v257 = vmul.f32 %v159, %v159
        %v258 = vmul.f32 %v160, %v160
        %v259 = vadd.f32 %v255, %v256
        %v260 = vadd.f32 %v259, %v257
        %v261 = vadd.f32 %v260, %v258
        %v262 = vrot.slane %v261, 4
        %v263 = vadd.f32 %v261, %v262
        %v264 = vrot.slane %v263, 2
        %v265 = vadd.f32 %v263, %v264
        %v266 = vrot.slane %v265, 1
        %v267 = vadd.f32 %v265, %v266
        %v268 = vmax.f32 %v267, 1e-24
        %v269 = vrsqrt.pop %v268
        %v270 = vmul.f32 %v161, %v161
        %v271 = vmul.f32 %v162, %v162
        %v272 = vmul.f32 %v163, %v163
        %v273 = vmul.f32 %v164, %v164
        %v274 = vadd.f32 %v270, %v271
        %v275 = vadd.f32 %v274, %v272
        %v276 = vadd.f32 %v275, %v273
        %v277 = vrot.slane %v276, 4
        %v278 = vadd.f32 %v276, %v277
        %v279 = vrot.slane %v278, 2
        %v280 = vadd.f32 %v278, %v279
        %v281 = vrot.slane %v280, 1
        %v282 = vadd.f32 %v280, %v281
        %v283 = vmax.f32 %v282, 1e-24
        %v284 = vrsqrt.pop %v283
        %v285 = vmul.f32 %v179, 10.0
        %v286 = vmul.f32 %v133, %v137
        %v287 = vmul.f32 %v134, %v138
        %v288 = vmul.f32 %v135, %v139
        %v289 = vmul.f32 %v136, %v140
        %v290 = vadd.f32 %v286, %v287
        %v291 = vadd.f32 %v290, %v288
        %v292 = vadd.f32 %v291, %v289
        %v293 = vrot.slane %v292, 4
        %v294 = vadd.f32 %v292, %v293
        %v295 = vrot.slane %v294, 2
        %v296 = vadd.f32 %v294, %v295
        %v297 = vrot.slane %v296, 1
        %v298 = vadd.f32 %v296, %v297
        %v299 = vmul.f32 %v285, %v194
        %v300 = vmul.f32 %v298, %v299
        %v301 = vmul.f32 %v300, 1.442695
        %v302 = vpow.pop %v301
        %v303 = vadd.f32 %v302, 0.0
        %v304 = vmul.f32 %v133, %v141
        %v305 = vmul.f32 %v134, %v142
        %v306 = vmul.f32 %v135, %v143
        %v307 = vmul.f32 %v136, %v144
        %v308 = vadd.f32 %v304, %v305
        %v309 = vadd.f32 %v308, %v306
        %v310 = vadd.f32 %v309, %v307
        %v311 = vrot.slane %v310, 4
        %v312 = vadd.f32 %v310, %v311
        %v313 = vrot.slane %v312, 2
        %v314 = vadd.f32 %v312, %v313
        %v315 = vrot.slane %v314, 1
        %v316 = vadd.f32 %v314, %v315
        %v317 = vmul.f32 %v285, %v209
        %v318 = vmul.f32 %v316, %v317
        %v319 = vmul.f32 %v318, 1.442695
        %v320 = vpow.pop %v319
        %v321 = vadd.f32 %v320, 0.0
        %v322 = vmul.f32 %v133, %v145
        %v323 = vmul.f32 %v134, %v146
        %v324 = vmul.f32 %v135, %v147
        %v325 = vmul.f32 %v136, %v148
        %v326 = vadd.f32 %v322, %v323
        %v327 = vadd.f32 %v326, %v324
        %v328 = vadd.f32 %v327, %v325
        %v329 = vrot.slane %v328, 4
        %v330 = vadd.f32 %v328, %v329
        %v331 = vrot.slane %v330, 2
        %v332 = vadd.f32 %v330, %v331
        %v333 = vrot.slane %v332, 1
        %v334 = vadd.f32 %v332, %v333
        %v335 = vmul.f32 %v285, %v224
        %v336 = vmul.f32 %v334, %v335
        %v337 = vmul.f32 %v336, 1.442695
        %v338 = vpow.pop %v337
        %v339 = vadd.f32 %v338, 0.0
        %v340 = vmul.f32 %v133, %v149
        %v341 = vmul.f32 %v134, %v150
        %v342 = vmul.f32 %v135, %v151
        %v343 = vmul.f32 %v136, %v152
        %v344 = vadd.f32 %v340, %v341
        %v345 = vadd.f32 %v344, %v342
        %v346 = vadd.f32 %v345, %v343
        %v347 = vrot.slane %v346, 4
        %v348 = vadd.f32 %v346, %v347
        %v349 = vrot.slane %v348, 2
        %v350 = vadd.f32 %v348, %v349
        %v351 = vrot.slane %v350, 1
        %v352 = vadd.f32 %v350, %v351
        %v353 = vmul.f32 %v285, %v239
        %v354 = vmul.f32 %v352, %v353
        %v355 = vmul.f32 %v354, 1.442695
        %v356 = vpow.pop %v355
        %v357 = vadd.f32 %v356, 0.0
        %v358 = vmul.f32 %v133, %v153
        %v359 = vmul.f32 %v134, %v154
        %v360 = vmul.f32 %v135, %v155
        %v361 = vmul.f32 %v136, %v156
        %v362 = vadd.f32 %v358, %v359
        %v363 = vadd.f32 %v362, %v360
        %v364 = vadd.f32 %v363, %v361
        %v365 = vrot.slane %v364, 4
        %v366 = vadd.f32 %v364, %v365
        %v367 = vrot.slane %v366, 2
        %v368 = vadd.f32 %v366, %v367
        %v369 = vrot.slane %v368, 1
        %v370 = vadd.f32 %v368, %v369
        %v371 = vmul.f32 %v285, %v254
        %v372 = vmul.f32 %v370, %v371
        %v373 = vmul.f32 %v372, 1.442695
        %v374 = vpow.pop %v373
        %v375 = vadd.f32 %v374, 0.0
        %v376 = vmul.f32 %v133, %v157
        %v377 = vmul.f32 %v134, %v158
        %v378 = vmul.f32 %v135, %v159
        %v379 = vmul.f32 %v136, %v160
        %v380 = vadd.f32 %v376, %v377
        %v381 = vadd.f32 %v380, %v378
        %v382 = vadd.f32 %v381, %v379
        %v383 = vrot.slane %v382, 4
        %v384 = vadd.f32 %v382, %v383
        %v385 = vrot.slane %v384, 2
        %v386 = vadd.f32 %v384, %v385
        %v387 = vrot.slane %v386, 1
        %v388 = vadd.f32 %v386, %v387
        %v389 = vmul.f32 %v285, %v269
        %v390 = vmul.f32 %v388, %v389
        %v391 = vmul.f32 %v390, 1.442695
        %v392 = vpow.pop %v391
        %v393 = vadd.f32 %v392, 0.0
        %v394 = vmul.f32 %v133, %v161
        %v395 = vmul.f32 %v134, %v162
        %v396 = vmul.f32 %v135, %v163
        %v397 = vmul.f32 %v136, %v164
        %v398 = vadd.f32 %v394, %v395
        %v399 = vadd.f32 %v398, %v396
        %v400 = vadd.f32 %v399, %v397
        %v401 = vrot.slane %v400, 4
        %v402 = vadd.f32 %v400, %v401
        %v403 = vrot.slane %v402, 2
        %v404 = vadd.f32 %v402, %v403
        %v405 = vrot.slane %v404, 1
        %v406 = vadd.f32 %v404, %v405
        %v407 = vmul.f32 %v285, %v284
        %v408 = vmul.f32 %v406, %v407
        %v409 = vmul.f32 %v408, 1.442695
        %v410 = vpow.pop %v409
        %v411 = vadd.f32 %v410, 0.0
        %v412 = vmul.f32 %v194, 10.0
        %v413 = vmul.f32 %v137, %v141
        %v414 = vmul.f32 %v138, %v142
        %v415 = vmul.f32 %v139, %v143
        %v416 = vmul.f32 %v140, %v144
        %v417 = vadd.f32 %v413, %v414
        %v418 = vadd.f32 %v417, %v415
        %v419 = vadd.f32 %v418, %v416
        %v420 = vrot.slane %v419, 4
        %v421 = vadd.f32 %v419, %v420
        %v422 = vrot.slane %v421, 2
        %v423 = vadd.f32 %v421, %v422
        %v424 = vrot.slane %v423, 1
        %v425 = vadd.f32 %v423, %v424
        %v426 = vmul.f32 %v412, %v209
        %v427 = vmul.f32 %v425, %v426
        %v428 = vmul.f32 %v427, 1.442695
        %v429 = vpow.pop %v428
        %v430 = vadd.f32 %v303, %v429
        %v431 = vadd.f32 %v321, %v429
        %v432 = vmul.f32 %v137, %v145
        %v433 = vmul.f32 %v138, %v146
        %v434 = vmul.f32 %v139, %v147
        %v435 = vmul.f32 %v140, %v148
        %v436 = vadd.f32 %v432, %v433
        %v437 = vadd.f32 %v436, %v434
        %v438 = vadd.f32 %v437, %v435
        %v439 = vrot.slane %v438, 4
        %v440 = vadd.f32 %v438, %v439
        %v441 = vrot.slane %v440, 2
        %v442 = vadd.f32 %v440, %v441
        %v443 = vrot.slane %v442, 1
        %v444 = vadd.f32 %v442, %v443
        %v445 = vmul.f32 %v412, %v224
        %v446 = vmul.f32 %v444, %v445
        %v447 = vmul.f32 %v446, 1.442695
        %v448 = vpow.pop %v447
        %v449 = vadd.f32 %v430, %v448
        %v450 = vadd.f32 %v339, %v448
        %v451 = vmul.f32 %v137, %v149
        %v452 = vmul.f32 %v138, %v150
        %v453 = vmul.f32 %v139, %v151
        %v454 = vmul.f32 %v140, %v152
        %v455 = vadd.f32 %v451, %v452
        %v456 = vadd.f32 %v455, %v453
        %v457 = vadd.f32 %v456, %v454
        %v458 = vrot.slane %v457, 4
        %v459 = vadd.f32 %v457, %v458
        %v460 = vrot.slane %v459, 2
        %v461 = vadd.f32 %v459, %v460
        %v462 = vrot.slane %v461, 1
        %v463 = vadd.f32 %v461, %v462
        %v464 = vmul.f32 %v412, %v239
        %v465 = vmul.f32 %v463, %v464
        %v466 = vmul.f32 %v465, 1.442695
        %v467 = vpow.pop %v466
        %v468 = vadd.f32 %v449, %v467
        %v469 = vadd.f32 %v357, %v467
        %v470 = vmul.f32 %v137, %v153
        %v471 = vmul.f32 %v138, %v154
        %v472 = vmul.f32 %v139, %v155
        %v473 = vmul.f32 %v140, %v156
        %v474 = vadd.f32 %v470, %v471
        %v475 = vadd.f32 %v474, %v472
        %v476 = vadd.f32 %v475, %v473
        %v477 = vrot.slane %v476, 4
        %v478 = vadd.f32 %v476, %v477
        %v479 = vrot.slane %v478, 2
        %v480 = vadd.f32 %v478, %v479
        %v481 = vrot.slane %v480, 1
        %v482 = vadd.f32 %v480, %v481
        %v483 = vmul.f32 %v412, %v254
        %v484 = vmul.f32 %v482, %v483
        %v485 = vmul.f32 %v484, 1.442695
        %v486 = vpow.pop %v485
        %v487 = vadd.f32 %v468, %v486
        %v488 = vadd.f32 %v375, %v486
        %v489 = vmul.f32 %v137, %v157
        %v490 = vmul.f32 %v138, %v158
        %v491 = vmul.f32 %v139, %v159
        %v492 = vmul.f32 %v140, %v160
        %v493 = vadd.f32 %v489, %v490
        %v494 = vadd.f32 %v493, %v491
        %v495 = vadd.f32 %v494, %v492
        %v496 = vrot.slane %v495, 4
        %v497 = vadd.f32 %v495, %v496
        %v498 = vrot.slane %v497, 2
        %v499 = vadd.f32 %v497, %v498
        %v500 = vrot.slane %v499, 1
        %v501 = vadd.f32 %v499, %v500
        %v502 = vmul.f32 %v412, %v269
        %v503 = vmul.f32 %v501, %v502
        %v504 = vmul.f32 %v503, 1.442695
        %v505 = vpow.pop %v504
        %v506 = vadd.f32 %v487, %v505
        %v507 = vadd.f32 %v393, %v505
        %v508 = vmul.f32 %v137, %v161
        %v509 = vmul.f32 %v138, %v162
        %v510 = vmul.f32 %v139, %v163
        %v511 = vmul.f32 %v140, %v164
        %v512 = vadd.f32 %v508, %v509
        %v513 = vadd.f32 %v512, %v510
        %v514 = vadd.f32 %v513, %v511
        %v515 = vrot.slane %v514, 4
        %v516 = vadd.f32 %v514, %v515
        %v517 = vrot.slane %v516, 2
        %v518 = vadd.f32 %v516, %v517
        %v519 = vrot.slane %v518, 1
        %v520 = vadd.f32 %v518, %v519
        %v521 = vmul.f32 %v412, %v284
        %v522 = vmul.f32 %v520, %v521
        %v523 = vmul.f32 %v522, 1.442695
        %v524 = vpow.pop %v523
        %v525 = vadd.f32 %v506, %v524
        %v526 = vadd.f32 %v411, %v524
        %v527 = vmul.f32 %v209, 10.0
        %v528 = vmul.f32 %v141, %v145
        %v529 = vmul.f32 %v142, %v146
        %v530 = vmul.f32 %v143, %v147
        %v531 = vmul.f32 %v144, %v148
        %v532 = vadd.f32 %v528, %v529
        %v533 = vadd.f32 %v532, %v530
        %v534 = vadd.f32 %v533, %v531
        %v535 = vrot.slane %v534, 4
        %v536 = vadd.f32 %v534, %v535
        %v537 = vrot.slane %v536, 2
        %v538 = vadd.f32 %v536, %v537
        %v539 = vrot.slane %v538, 1
        %v540 = vadd.f32 %v538, %v539
        %v541 = vmul.f32 %v527, %v224
        %v542 = vmul.f32 %v540, %v541
        %v543 = vmul.f32 %v542, 1.442695
        %v544 = vpow.pop %v543
        %v545 = vadd.f32 %v431, %v544
        %v546 = vadd.f32 %v450, %v544
        %v547 = vmul.f32 %v141, %v149
        %v548 = vmul.f32 %v142, %v150
        %v549 = vmul.f32 %v143, %v151
        %v550 = vmul.f32 %v144, %v152
        %v551 = vadd.f32 %v547, %v548
        %v552 = vadd.f32 %v551, %v549
        %v553 = vadd.f32 %v552, %v550
        %v554 = vrot.slane %v553, 4
        %v555 = vadd.f32 %v553, %v554
        %v556 = vrot.slane %v555, 2
        %v557 = vadd.f32 %v555, %v556
        %v558 = vrot.slane %v557, 1
        %v559 = vadd.f32 %v557, %v558
        %v560 = vmul.f32 %v527, %v239
        %v561 = vmul.f32 %v559, %v560
        %v562 = vmul.f32 %v561, 1.442695
        %v563 = vpow.pop %v562
        %v564 = vadd.f32 %v545, %v563
        %v565 = vadd.f32 %v469, %v563
        %v566 = vmul.f32 %v141, %v153
        %v567 = vmul.f32 %v142, %v154
        %v568 = vmul.f32 %v143, %v155
        %v569 = vmul.f32 %v144, %v156
        %v570 = vadd.f32 %v566, %v567
        %v571 = vadd.f32 %v570, %v568
        %v572 = vadd.f32 %v571, %v569
        %v573 = vrot.slane %v572, 4
        %v574 = vadd.f32 %v572, %v573
        %v575 = vrot.slane %v574, 2
        %v576 = vadd.f32 %v574, %v575
        %v577 = vrot.slane %v576, 1
        %v578 = vadd.f32 %v576, %v577
        %v579 = vmul.f32 %v527, %v254
        %v580 = vmul.f32 %v578, %v579
        %v581 = vmul.f32 %v580, 1.442695
        %v582 = vpow.pop %v581
        %v583 = vadd.f32 %v564, %v582
        %v584 = vadd.f32 %v488, %v582
        %v585 = vmul.f32 %v141, %v157
        %v586 = vmul.f32 %v142, %v158
        %v587 = vmul.f32 %v143, %v159
        %v588 = vmul.f32 %v144, %v160
        %v589 = vadd.f32 %v585, %v586
        %v590 = vadd.f32 %v589, %v587
        %v591 = vadd.f32 %v590, %v588
        %v592 = vrot.slane %v591, 4
        %v593 = vadd.f32 %v591, %v592
        %v594 = vrot.slane %v593, 2
        %v595 = vadd.f32 %v593, %v594
        %v596 = vrot.slane %v595, 1
        %v597 = vadd.f32 %v595, %v596
        %v598 = vmul.f32 %v527, %v269
        %v599 = vmul.f32 %v597, %v598
        %v600 = vmul.f32 %v599, 1.442695
        %v601 = vpow.pop %v600
        %v602 = vadd.f32 %v583, %v601
        %v603 = vadd.f32 %v507, %v601
        %v604 = vmul.f32 %v141, %v161
        %v605 = vmul.f32 %v142, %v162
        %v606 = vmul.f32 %v143, %v163
        %v607 = vmul.f32 %v144, %v164
        %v608 = vadd.f32 %v604, %v605
        %v609 = vadd.f32 %v608, %v606
        %v610 = vadd.f32 %v609, %v607
        %v611 = vrot.slane %v610, 4
        %v612 = vadd.f32 %v610, %v611
        %v613 = vrot.slane %v612, 2
        %v614 = vadd.f32 %v612, %v613
        %v615 = vrot.slane %v614, 1
        %v616 = vadd.f32 %v614, %v615
        %v617 = vmul.f32 %v527, %v284
        %v618 = vmul.f32 %v616, %v617
        %v619 = vmul.f32 %v618, 1.442695
        %v620 = vpow.pop %v619
        %v621 = vadd.f32 %v602, %v620
        %v622 = vadd.f32 %v526, %v620
        %v623 = vmul.f32 %v224, 10.0
        %v624 = vmul.f32 %v145, %v149
        %v625 = vmul.f32 %v146, %v150
        %v626 = vmul.f32 %v147, %v151
        %v627 = vmul.f32 %v148, %v152
        %v628 = vadd.f32 %v624, %v625
        %v629 = vadd.f32 %v628, %v626
        %v630 = vadd.f32 %v629, %v627
        %v631 = vrot.slane %v630, 4
        %v632 = vadd.f32 %v630, %v631
        %v633 = vrot.slane %v632, 2
        %v634 = vadd.f32 %v632, %v633
        %v635 = vrot.slane %v634, 1
        %v636 = vadd.f32 %v634, %v635
        %v637 = vmul.f32 %v623, %v239
        %v638 = vmul.f32 %v636, %v637
        %v639 = vmul.f32 %v638, 1.442695
        %v640 = vpow.pop %v639
        %v641 = vadd.f32 %v546, %v640
        %v642 = vadd.f32 %v565, %v640
        %v643 = vmul.f32 %v145, %v153
        %v644 = vmul.f32 %v146, %v154
        %v645 = vmul.f32 %v147, %v155
        %v646 = vmul.f32 %v148, %v156
        %v647 = vadd.f32 %v643, %v644
        %v648 = vadd.f32 %v647, %v645
        %v649 = vadd.f32 %v648, %v646
        %v650 = vrot.slane %v649, 4
        %v651 = vadd.f32 %v649, %v650
        %v652 = vrot.slane %v651, 2
        %v653 = vadd.f32 %v651, %v652
        %v654 = vrot.slane %v653, 1
        %v655 = vadd.f32 %v653, %v654
        %v656 = vmul.f32 %v623, %v254
        %v657 = vmul.f32 %v655, %v656
        %v658 = vmul.f32 %v657, 1.442695
        %v659 = vpow.pop %v658
        %v660 = vadd.f32 %v641, %v659
        %v661 = vadd.f32 %v584, %v659
        %v662 = vmul.f32 %v145, %v157
        %v663 = vmul.f32 %v146, %v158
        %v664 = vmul.f32 %v147, %v159
        %v665 = vmul.f32 %v148, %v160
        %v666 = vadd.f32 %v662, %v663
        %v667 = vadd.f32 %v666, %v664
        %v668 = vadd.f32 %v667, %v665
        %v669 = vrot.slane %v668, 4
        %v670 = vadd.f32 %v668, %v669
        %v671 = vrot.slane %v670, 2
        %v672 = vadd.f32 %v670, %v671
        %v673 = vrot.slane %v672, 1
        %v674 = vadd.f32 %v672, %v673
        %v675 = vmul.f32 %v623, %v269
        %v676 = vmul.f32 %v674, %v675
        %v677 = vmul.f32 %v676, 1.442695
        %v678 = vpow.pop %v677
        %v679 = vadd.f32 %v660, %v678
        %v680 = vadd.f32 %v603, %v678
        %v681 = vmul.f32 %v145, %v161
        %v682 = vmul.f32 %v146, %v162
        %v683 = vmul.f32 %v147, %v163
        %v684 = vmul.f32 %v148, %v164
        %v685 = vadd.f32 %v681, %v682
        %v686 = vadd.f32 %v685, %v683
        %v687 = vadd.f32 %v686, %v684
        %v688 = vrot.slane %v687, 4
        %v689 = vadd.f32 %v687, %v688
        %v690 = vrot.slane %v689, 2
        %v691 = vadd.f32 %v689, %v690
        %v692 = vrot.slane %v691, 1
        %v693 = vadd.f32 %v691, %v692
        %v694 = vmul.f32 %v623, %v284
        %v695 = vmul.f32 %v693, %v694
        %v696 = vmul.f32 %v695, 1.442695
        %v697 = vpow.pop %v696
        %v698 = vadd.f32 %v679, %v697
        %v699 = vadd.f32 %v622, %v697
        %v700 = vmul.f32 %v239, 10.0
        %v701 = vmul.f32 %v149, %v153
        %v702 = vmul.f32 %v150, %v154
        %v703 = vmul.f32 %v151, %v155
        %v704 = vmul.f32 %v152, %v156
        %v705 = vadd.f32 %v701, %v702
        %v706 = vadd.f32 %v705, %v703
        %v707 = vadd.f32 %v706, %v704
        %v708 = vrot.slane %v707, 4
        %v709 = vadd.f32 %v707, %v708
        %v710 = vrot.slane %v709, 2
        %v711 = vadd.f32 %v709, %v710
        %v712 = vrot.slane %v711, 1
        %v713 = vadd.f32 %v711, %v712
        %v714 = vmul.f32 %v700, %v254
        %v715 = vmul.f32 %v713, %v714
        %v716 = vmul.f32 %v715, 1.442695
        %v717 = vpow.pop %v716
        %v718 = vadd.f32 %v642, %v717
        %v719 = vadd.f32 %v661, %v717
        %v720 = vmul.f32 %v149, %v157
        %v721 = vmul.f32 %v150, %v158
        %v722 = vmul.f32 %v151, %v159
        %v723 = vmul.f32 %v152, %v160
        %v724 = vadd.f32 %v720, %v721
        %v725 = vadd.f32 %v724, %v722
        %v726 = vadd.f32 %v725, %v723
        %v727 = vrot.slane %v726, 4
        %v728 = vadd.f32 %v726, %v727
        %v729 = vrot.slane %v728, 2
        %v730 = vadd.f32 %v728, %v729
        %v731 = vrot.slane %v730, 1
        %v732 = vadd.f32 %v730, %v731
        %v733 = vmul.f32 %v700, %v269
        %v734 = vmul.f32 %v732, %v733
        %v735 = vmul.f32 %v734, 1.442695
        %v736 = vpow.pop %v735
        %v737 = vadd.f32 %v718, %v736
        %v738 = vadd.f32 %v680, %v736
        %v739 = vmul.f32 %v149, %v161
        %v740 = vmul.f32 %v150, %v162
        %v741 = vmul.f32 %v151, %v163
        %v742 = vmul.f32 %v152, %v164
        %v743 = vadd.f32 %v739, %v740
        %v744 = vadd.f32 %v743, %v741
        %v745 = vadd.f32 %v744, %v742
        %v746 = vrot.slane %v745, 4
        %v747 = vadd.f32 %v745, %v746
        %v748 = vrot.slane %v747, 2
        %v749 = vadd.f32 %v747, %v748
        %v750 = vrot.slane %v749, 1
        %v751 = vadd.f32 %v749, %v750
        %v752 = vmul.f32 %v700, %v284
        %v753 = vmul.f32 %v751, %v752
        %v754 = vmul.f32 %v753, 1.442695
        %v755 = vpow.pop %v754
        %v756 = vadd.f32 %v737, %v755
        %v757 = vadd.f32 %v699, %v755
        %v758 = vmul.f32 %v254, 10.0
        %v759 = vmul.f32 %v153, %v157
        %v760 = vmul.f32 %v154, %v158
        %v761 = vmul.f32 %v155, %v159
        %v762 = vmul.f32 %v156, %v160
        %v763 = vadd.f32 %v759, %v760
        %v764 = vadd.f32 %v763, %v761
        %v765 = vadd.f32 %v764, %v762
        %v766 = vrot.slane %v765, 4
        %v767 = vadd.f32 %v765, %v766
        %v768 = vrot.slane %v767, 2
        %v769 = vadd.f32 %v767, %v768
        %v770 = vrot.slane %v769, 1
        %v771 = vadd.f32 %v769, %v770
        %v772 = vmul.f32 %v758, %v269
        %v773 = vmul.f32 %v771, %v772
        %v774 = vmul.f32 %v773, 1.442695
        %v775 = vpow.pop %v774
        %v776 = vadd.f32 %v719, %v775
        %v777 = vadd.f32 %v738, %v775
        %v778 = vmul.f32 %v153, %v161
        %v779 = vmul.f32 %v154, %v162
        %v780 = vmul.f32 %v155, %v163
        %v781 = vmul.f32 %v156, %v164
        %v782 = vadd.f32 %v778, %v779
        %v783 = vadd.f32 %v782, %v780
        %v784 = vadd.f32 %v783, %v781
        %v785 = vrot.slane %v784, 4
        %v786 = vadd.f32 %v784, %v785
        %v787 = vrot.slane %v786, 2
        %v788 = vadd.f32 %v786, %v787
        %v789 = vrot.slane %v788, 1
        %v790 = vadd.f32 %v788, %v789
        %v791 = vmul.f32 %v758, %v284
        %v792 = vmul.f32 %v790, %v791
        %v793 = vmul.f32 %v792, 1.442695
        %v794 = vpow.pop %v793
        %v795 = vadd.f32 %v776, %v794
        %v796 = vadd.f32 %v757, %v794
        %v797 = vmul.f32 %v269, 10.0
        %v798 = vmul.f32 %v157, %v161
        %v799 = vmul.f32 %v158, %v162
        %v800 = vmul.f32 %v159, %v163
        %v801 = vmul.f32 %v160, %v164
        %v802 = vadd.f32 %v798, %v799
        %v803 = vadd.f32 %v802, %v800
        %v804 = vadd.f32 %v803, %v801
        %v805 = vrot.slane %v804, 4
        %v806 = vadd.f32 %v804, %v805
        %v807 = vrot.slane %v806, 2
        %v808 = vadd.f32 %v806, %v807
        %v809 = vrot.slane %v808, 1
        %v810 = vadd.f32 %v808, %v809
        %v811 = vmul.f32 %v797, %v284
        %v812 = vmul.f32 %v810, %v811
        %v813 = vmul.f32 %v812, 1.442695
        %v814 = vpow.pop %v813
        %v815 = vadd.f32 %v777, %v814
        %v816 = vadd.f32 %v796, %v814
        %v817 = vlog2.pop %v525
        %v818 = vmul.f32 %v817, 0.6931472
        %v819 = vsub.f32 %v818, %v300
        %v820 = vadd.f32 %v819, 0.0
        %v821 = vlog2.pop %v621
        %v822 = vmul.f32 %v821, 0.6931472
        %v823 = vsub.f32 %v822, %v318
        %v824 = vadd.f32 %v820, %v823
        %v825 = vlog2.pop %v698
        %v826 = vmul.f32 %v825, 0.6931472
        %v827 = vsub.f32 %v826, %v336
        %v828 = vadd.f32 %v824, %v827
        %v829 = vlog2.pop %v756
        %v830 = vmul.f32 %v829, 0.6931472
        %v831 = vsub.f32 %v830, %v354
        %v832 = vadd.f32 %v828, %v831
        %v833 = vlog2.pop %v795
        %v834 = vmul.f32 %v833, 0.6931472
        %v835 = vsub.f32 %v834, %v372
        %v836 = vadd.f32 %v832, %v835
        %v837 = vlog2.pop %v815
        %v838 = vmul.f32 %v837, 0.6931472
        %v839 = vsub.f32 %v838, %v390
        %v840 = vadd.f32 %v836, %v839
        %v841 = vlog2.pop %v816
        %v842 = vmul.f32 %v841, 0.6931472
        %v843 = vsub.f32 %v842, %v408
        %v844 = vadd.f32 %v840, %v843
        %v845 = vmul.f32 %v844, 0.07341405
        %846 = vst [vmem:[%s132] sm:$0x1] %v845
        %s847 = sand.u32 %s52, 1
        %s848 = scalar_lea.sflag [#allocation4], %s847
        %s849 = sand.u32 %s52, 1
        %s850 = scalar_lea.vmem [#allocation5], %s849
        // Predicated region
        $region29: #{tpu_custom_call.1} parent=23 // pred_check
          %p851 = pneg %p62
        $region30: #{tpu_custom_call.1} parent=23 // pred_check_branch
          %853 = sbr.rel (%p851) target = $region32
        $region31: #{tpu_custom_call.1} parent=23 // pred_region
          %s855 = ssub.s32 16, 16
          %856 = vsyncadd %s848, %s855
          %s857 = smul.addr %s18, 16
          %s858 = scalar_lea.hbm %s1, %s857
          %s860 = sshll.u32 %s850, 4
          %s861 = int_to_ptr.vmem [resolvable:$true] %s860
          %863 = dma.vmem_to_hbm [thread:$0]  %s861, 16, %s858, %s848
        $region32: #{tpu_custom_call.1} parent=23 // pred_fallthru
          _
      $region24: #{tpu_custom_call.1} parent=5 // pred_fallthru
        _
      %p864 = scmp.le.s32.totalorder 2, %s13
      // Predicated region
      $region33: #{tpu_custom_call.1} parent=5 // pred_check
        %p865 = pneg %p864
      $region34: #{tpu_custom_call.1} parent=5 // pred_check_branch
        %867 = sbr.rel (%p865) target = $region36
      $region35: #{tpu_custom_call.1} parent=5 // pred_region
        %s868 = ssub.s32 %s13, 2
        // Predicated region
        $region37: #{tpu_custom_call.1} parent=35 // pred_check
          %p869 = pneg %p68
        $region38: #{tpu_custom_call.1} parent=35 // pred_check_branch
          %871 = sbr.rel (%p869) target = $region40
        $region39: #{tpu_custom_call.1} parent=35 // pred_region
          %s872 = sand.u32 %s53, 1
          %s873 = scalar_lea.sflag [#allocation4], %s872
          %s874 = sand.u32 %s53, 1
          %s875 = scalar_lea.vmem [#allocation5], %s874
          %876 = dma.done %s873, 16
        $region40: #{tpu_custom_call.1} parent=35 // pred_fallthru
          _
      $region36: #{tpu_custom_call.1} parent=5 // pred_fallthru
        _
    $region6: #{tpu_custom_call.1} parent=1 // loop_footer
      %s17 = sadd.s32 1, %s13
    $region7: #{tpu_custom_call.1} parent=1 // loop_footer_branch
      %12 = sbr.rel target = $region3
    $region8: #{tpu_custom_call.1} parent=1 // loop_exit
      _
    %877 = vsyncpa [#allocation3], 1
    %s878 = scalar_lea.sflag [#allocation3], 1
    %879 = vsyncpa %s878, 1
    %880 = vsyncpa [#allocation4], 1
    %s881 = scalar_lea.sflag [#allocation4], 1
    %882 = vsyncpa %s881, 1

</llo_original>
